<compile_context>
chip_gen: v7x
topology: tpu7x:2x2x1
jax: 0.10.0
libtpu: 0.0.40
codegen_flags: <defaults>
</compile_context>

<pallas_src>
import jax
import jax.numpy as jnp
from jax.experimental import pallas as pl
from jax.experimental.pallas import tpu as pltpu


def net_kernel(x_ref, w_ref, b_ref, o_ref):
    # x_ref: (TB, D) native dtype, VMEM
    # w_ref: (1, D)  f32, VMEM   -- folded fc1->fc2 weights, lane-dense row
    # b_ref: (1,)    f32, SMEM   -- folded bias scalar
    # o_ref: (1, TB) f32, VMEM   -- lane-dense: batch on the lane axis
    x = x_ref[...].astype(jnp.float32)                        # in-kernel cast
    y = jnp.sum(x * w_ref[...], axis=-1, keepdims=True)       # (TB,1): VPU mul + XLU reduce
    y = y + b_ref[0]
    o_ref[...] = y.reshape(o_ref.shape).astype(o_ref.dtype)   # store lane-dense (1, TB)


def fold_params(w1, b1, w2, b2):
    """One-time weight prep (hoisted out of the per-call hot path).

    Folds fc2 into fc1.  Valid ONLY because Net.forward() applies no
    nonlinearity between fc1 and fc2.  Weights are stored transposed relative
    to PyTorch's (out, in): w1 (D,H), b1 (1,H), w2 (H,1), b2 (1,1).
    """
    D = w1.shape[0]
    w_eff = (w1 @ w2).reshape(1, D).astype(jnp.float32)     # (1, D)
    b_eff = (b1 @ w2 + b2).reshape(1).astype(jnp.float32)   # (1,)
    return w_eff, b_eff


def _pick_tb(B, D, itemsize):
    # Rows per grid step.  Small batch: single block (block dims == full dims,
    # so the (8,128) divisibility rule is satisfied).  Large batch: largest
    # multiple of 8 (<=512) whose double-buffered x tile stays inside the
    # smallest scoped-VMEM default across TPU generations.
    if B <= 256:
        return B
    per_buf_bytes = 4 << 20                      # ~4 MiB per x buffer (x2 buffers)
    tb = min(512, per_buf_bytes // max(1, D * itemsize), (B // 8) * 8)
    return max(8, (tb // 8) * 8)


def _net_forward(x, w_eff, b_eff):
    B = x.shape[0]
    x2d = x.reshape(B, -1)                       # torch.flatten(x, 1): metadata-only
    D = x2d.shape[1]
    assert w_eff.shape == (1, D) and b_eff.shape == (1,)

    tb = _pick_tb(B, D, x2d.dtype.itemsize)
    nb = pl.cdiv(B, tb)

    out = pl.pallas_call(
        net_kernel,
        out_shape=jax.ShapeDtypeStruct((nb, tb), jnp.float32),
        grid=(nb,),
        in_specs=[
            pl.BlockSpec((tb, D), lambda i: (i, 0)),              # x rows for this step
            pl.BlockSpec((1, D), lambda i: (0, 0)),               # w_eff (same block every step)
            pl.BlockSpec(memory_space=pltpu.MemorySpace.SMEM),    # b_eff scalar
        ],
        out_specs=pl.BlockSpec((1, tb), lambda i: (i, 0)),        # lane-dense output slab
        compiler_params=pltpu.CompilerParams(
            dimension_semantics=("parallel",),                    # shards batch across TCs (v7x)
        ),
    )(x2d, w_eff, b_eff)

    # (nb, tb) lane-dense slab -> (B, 1).  Contiguous reshape + slice, fused
    # under jit (tail rows of a ragged last block are dropped here).
    return out.reshape(nb * tb)[:B][:, None]


net_forward = jax.jit(_net_forward)


if __name__ == "__main__":
    # Small shapes consistent with the module: x = (batch=2, 4, 8) -> inputsize = 32
    key = jax.random.PRNGKey(0)
    k_x, k_w1, k_b1, k_w2, k_b2 = jax.random.split(key, 5)

    B, C, S = 2, 4, 8
    inputsize = C * S          # 32 -> Net(32): fc1 (32 -> 10), fc2 (10 -> 1)
    hidden = 10

    x = jax.random.normal(k_x, (B, C, S), dtype=jnp.float32)

    # PyTorch-style uniform init bounds (1/sqrt(fan_in)), stored transposed
    # relative to torch's (out_features, in_features).
    bound1 = 1.0 / jnp.sqrt(inputsize)
    w1 = jax.random.uniform(k_w1, (inputsize, hidden), jnp.float32, -bound1, bound1)
    b1 = jax.random.uniform(k_b1, (1, hidden), jnp.float32, -bound1, bound1)

    bound2 = 1.0 / jnp.sqrt(hidden)
    w2 = jax.random.uniform(k_w2, (hidden, 1), jnp.float32, -bound2, bound2)
    b2 = jax.random.uniform(k_b2, (1, 1), jnp.float32, -bound2, bound2)

    # One-time weight prep (hoisted out of the hot path).
    w_eff, b_eff = fold_params(w1, b1, w2, b2)
    w_eff, b_eff = jax.block_until_ready((w_eff, b_eff))

    out = net_forward(x, w_eff, b_eff)
    jax.block_until_ready(out)

    # Pure-JAX reference — mirrors the PyTorch forward exactly (two GEMMs, no fold).
    ref = x.reshape(B, -1) @ w1 + b1
    ref = ref @ w2 + b2
    assert out.shape == (B, 1)
    assert jnp.allclose(out, ref, atol=1e-5, rtol=1e-5)

    print("KERNEL_OK")
</pallas_src>

<mosaic_0001>
module attributes {stable_mosaic.version = 11 : i64} {
  func.func @net_kernel(%arg0: i32, %arg1: memref<2x32xf32, #tpu.memory_space<vmem>>, %arg2: memref<1x32xf32, #tpu.memory_space<vmem>>, %arg3: memref<1xf32, #tpu.memory_space<smem>>, %arg4: memref<1x2xf32, #tpu.memory_space<vmem>>) attributes {dimension_semantics = [#tpu.dimension_semantics<parallel>], iteration_bounds = array<i64: 1>, scalar_prefetch = 0 : i64, scratch_operands = 0 : i64, tpu.core_type = #tpu.core_type<tc>, window_params = [{transform_indices = @transform_0, window_bounds = array<i64: 2, 32>}, {pipeline_mode = #tpu.pipeline_mode<synchronous>, transform_indices = @transform_1, window_bounds = array<i64: 1, 32>}, {transform_indices = @transform_2, window_bounds = array<i64: 1>}, {transform_indices = @transform_3, window_bounds = array<i64: 1, 2>}]} {
    %c0 = arith.constant 0 : index
    %c0_0 = arith.constant 0 : index
    %0 = vector.load %arg1[%c0, %c0_0] : memref<2x32xf32, #tpu.memory_space<vmem>>, vector<2x32xf32>
    %c0_1 = arith.constant 0 : index
    %c0_2 = arith.constant 0 : index
    %1 = vector.load %arg2[%c0_1, %c0_2] : memref<1x32xf32, #tpu.memory_space<vmem>>, vector<1x32xf32>
    %2 = vector.broadcast %1 : vector<1x32xf32> to vector<2x32xf32>
    %3 = arith.mulf %0, %2 : vector<2x32xf32>
    %cst = arith.constant dense<0.000000e+00> : vector<2xf32>
    %4 = vector.multi_reduction <add>, %3, %cst [1] : vector<2x32xf32> to vector<2xf32>
    %5 = vector.shape_cast %4 : vector<2xf32> to vector<2x1xf32>
    %c0_3 = arith.constant 0 : index
    %6 = memref.load %arg3[%c0_3] : memref<1xf32, #tpu.memory_space<smem>>
    %7 = vector.broadcast %6 : f32 to vector<2x1xf32>
    %8 = arith.addf %5, %7 : vector<2x1xf32>
    %9 = vector.shape_cast %8 : vector<2x1xf32> to vector<1x2xf32>
    %c0_4 = arith.constant 0 : index
    %c0_5 = arith.constant 0 : index
    %10 = vector.load %arg4[%c0_4, %c0_5] : memref<1x2xf32, #tpu.memory_space<vmem>>, vector<1x2xf32>
    tpu.vector_store %arg4[%c0_4, %c0_5], %9 {strides = array<i32>} : memref<1x2xf32, #tpu.memory_space<vmem>>, vector<1x2xf32>,
    return
  }
  func.func @transform_0(%arg0: i32) -> (i32, i32) {
    %c0_i32 = arith.constant 0 : i32
    %c0_i32_0 = arith.constant 0 : i32
    return %arg0, %c0_i32 : i32, i32
  }
  func.func @transform_1(%arg0: i32) -> (i32, i32) {
    %c0_i32 = arith.constant 0 : i32
    %c0_i32_0 = arith.constant 0 : i32
    %c0_i32_1 = arith.constant 0 : i32
    return %c0_i32, %c0_i32_0 : i32, i32
  }
  func.func @transform_2(%arg0: i32) -> i32 {
    %c0_i32 = arith.constant 0 : i32
    %c0_i32_0 = arith.constant 0 : i32
    return %c0_i32 : i32
  }
  func.func @transform_3(%arg0: i32) -> (i32, i32) {
    %c0_i32 = arith.constant 0 : i32
    %c0_i32_0 = arith.constant 0 : i32
    return %arg0, %c0_i32 : i32, i32
  }
}

</mosaic_0001>

<llo_original>
// kernel: _net_forward.1
$region0: #{_net_forward.1}
  #allocation0 [shape = 'u32[]', space=smem, size = 0x4, offset = 0x4, fixed_abs, tag = 'smem constant byte address 0x4 - core index']
  #allocation1 [shape = 'u32[144,128]{1,0:T(1,128)}', space=vmem, size = 0x12000, scoped, tag = 'internal scratch']
  #allocation2 [shape = 'f32[1]{0:T(128)S(6)}', space=smem, size = 0x200, scoped, tag = 'scoped memory for _net_forward.1']
  %s0 = inlined_call_operand.vmem [shape: f32[2,32], index: 0, kind: input, shape index: {}]
  %s1 = inlined_call_operand.vmem [shape: f32[1,32], index: 1, kind: input, shape index: {}]
  %s2 = inlined_call_operand.<no memory space> [shape: f32[1], index: 2, kind: input, shape index: {}]
  %s3 = inlined_call_operand.hbm [shape: f32[1,2], index: 3, kind: output, shape index: {}]
  %s4 = sld [smem:[#allocation0]]
  $region22: #{_net_forward.1} parent=0
    _
  %s6 = ssub.s32 1, %s4
  %s7 = scalar_select 0, %s6, %s4
  %8 = sst [smem:[#allocation2]] %s2
  $region1: #{_net_forward.1} parent=0
    #allocation3 [shape = 'u8[512]{0}', space=vmem, size = 0x400, scoped, tag = 'output window, operand 0, single buffered']
    #allocation4 [shape = 's32[1]{0}', space=sflag, size = 0x4, scoped, tag = 'scoped memory for _net_forward.1']
    %9 = vsyncpa [#allocation4], 0
    // Predicated region
    $region2: #{_net_forward.1} parent=1 // pred_check
      _
    $region3: #{_net_forward.1} parent=1 // pred_check_branch
      %11 = sbr.rel (0) target = $region5
    $region4: #{_net_forward.1} parent=1 // pred_region
      _
    $region5: #{_net_forward.1} parent=1 // pred_fallthru
      _
    // Predicated region
    $region6: #{_net_forward.1} parent=1 // pred_check
      _
    $region7: #{_net_forward.1} parent=1 // pred_check_branch
      %13 = sbr.rel (0) target = $region9
    $region8: #{_net_forward.1} parent=1 // pred_region
      _
    $region9: #{_net_forward.1} parent=1 // pred_fallthru
      _
    // Predicated region
    $region10: #{_net_forward.1} parent=1 // pred_check
      _
    $region11: #{_net_forward.1} parent=1 // pred_check_branch
      %15 = sbr.rel (0) target = $region13
    $region12: #{_net_forward.1} parent=1 // pred_region
      _
    $region13: #{_net_forward.1} parent=1 // pred_fallthru
      _
    %v16 = vld [vmem:[%s0] sm:$0x3]
    %v17 = vld [vmem:[%s1] sm:$0x1]
    %v19 = vlaneseq
    %v20 = vshrl.u32 %v19, 7
    %v21 = vsub.s32 0, %v20
    %v22 = vrot.slane %v17, %v21
    %v24 = vmul.f32 %v16, %v22
    %vm25 = vcmask 254976
    %v26 = vsel %vm25, %v24, 0.0
    %27 = vadd.xlane.f32.xlu0 %v26
    %v28 = vpop.xlane.xlu0 %27
    %s29 = sld [smem:[#allocation2]]
    %v30 = vstv %s29
    %v31 = vadd.f32 %v28, %v30
    %v33 = vlaneseq
    %v34 = vand.u32 %v33, 127
    %v35 = vlaneseq
    %v36 = vshrl.u32 %v35, 7
    %v37 = vsub.s32 %v34, %v36
    %v38 = vrot.slane %v31, %v37
    %vm40 = vcmask 8192
    %41 = vst.msk [vmem:[#allocation3] sm:$0x1] %vm40, %v38
    // Predicated region
    $region14: #{_net_forward.1} parent=1 // pred_check
      _
    $region15: #{_net_forward.1} parent=1 // pred_check_branch
      %43 = sbr.rel (0) target = $region17
    $region16: #{_net_forward.1} parent=1 // pred_region
      %s45 = ssub.s32 16, 16
      %46 = vsyncadd [#allocation4], %s45
      %s48 = sshll.u32 [#allocation3], 4
      %s49 = int_to_ptr.vmem [resolvable:$true] %s48
      %51 = dma.vmem_to_hbm [thread:$0]  %s49, 16, %s3, [#allocation4]
    $region17: #{_net_forward.1} parent=1 // pred_fallthru
      _
    // Predicated region
    $region18: #{_net_forward.1} parent=1 // pred_check
      _
    $region19: #{_net_forward.1} parent=1 // pred_check_branch
      %53 = sbr.rel (0) target = $region21
    $region20: #{_net_forward.1} parent=1 // pred_region
      %54 = dma.done [#allocation4], 16
    $region21: #{_net_forward.1} parent=1 // pred_fallthru
      _
    %55 = vsyncpa [#allocation4], 1

</llo_original>
